<compile_context>
chip_gen: v6e
topology: v6e:2x2x1
jax: 0.10.0
libtpu: 0.0.40
codegen_flags: <defaults>
</compile_context>

<pallas_src>
import functools
import numpy as np
import jax
import jax.numpy as jnp
from jax.experimental import pallas as pl
from jax.experimental.pallas import tpu as pltpu


# ---------------------------------------------------------------------------
# Host-side helpers replicated from the PyTorch module
# ---------------------------------------------------------------------------
def create_mask(window_size, displacement, upper_lower, left_right):
    s = window_size ** 2
    mask = np.zeros((s, s), dtype=np.float32)
    if upper_lower:
        mask[-displacement * window_size:, :-displacement * window_size] = -np.inf
        mask[:-displacement * window_size, -displacement * window_size:] = -np.inf
    if left_right:
        mask = mask.reshape(window_size, window_size, window_size, window_size)
        mask[:, -displacement:, :, :-displacement] = -np.inf
        mask[:, :-displacement, :, -displacement:] = -np.inf
        mask = mask.reshape(s, s)
    return mask


def get_relative_distances(window_size):
    indices = np.array([[x, y] for x in range(window_size) for y in range(window_size)])
    return indices[None, :, :] - indices[:, None, :]


def _round_up(x, m):
    return (x + m - 1) // m * m


# ---------------------------------------------------------------------------
# Pallas kernels: tiled linear projections
# ---------------------------------------------------------------------------
def _linear_bias_kernel(x_ref, w_ref, b_ref, o_ref):
    o_ref[...] = (jnp.dot(x_ref[...], w_ref[...],
                          preferred_element_type=jnp.float32)
                  + b_ref[...]).astype(o_ref.dtype)


def _linear_nobias_kernel(x_ref, w_ref, o_ref):
    o_ref[...] = jnp.dot(x_ref[...], w_ref[...],
                         preferred_element_type=jnp.float32).astype(o_ref.dtype)


def pallas_linear(x, w, b=None, *, n_out=None, tm=256):
    """x: (M, K); w: (K, Np); optional b: (1, Np).  Returns (M, n_out).

    Tiled over M (double-buffered, "parallel" grid axis); the weight and bias
    use a constant index_map so they stay VMEM-resident across all row tiles.
    w / b may be pre-padded so Np is a multiple of 128 (lane-dense stores);
    otherwise they are padded here.
    """
    M, K = x.shape
    Np = w.shape[1]
    if n_out is None:
        n_out = Np
    if Np % 128 != 0:
        pad = _round_up(Np, 128) - Np
        w = jnp.pad(w, ((0, 0), (0, pad)))
        if b is not None:
            b = jnp.pad(b, ((0, 0), (0, pad)))
        Np = w.shape[1]

    tm = min(tm, M)
    Mp = _round_up(M, tm)
    if Mp != M:
        x = jnp.pad(x, ((0, Mp - M), (0, 0)))
    grid = (Mp // tm,)

    cp = pltpu.CompilerParams(dimension_semantics=("parallel",),
                              vmem_limit_bytes=32 * 1024 * 1024)

    if b is not None:
        out = pl.pallas_call(
            _linear_bias_kernel,
            out_shape=jax.ShapeDtypeStruct((Mp, Np), x.dtype),
            grid=grid,
            in_specs=[pl.BlockSpec((tm, K), lambda i: (i, 0)),
                      pl.BlockSpec((K, Np), lambda i: (0, 0)),
                      pl.BlockSpec((1, Np), lambda i: (0, 0))],
            out_specs=pl.BlockSpec((tm, Np), lambda i: (i, 0)),
            compiler_params=cp,
        )(x, w, b)
    else:
        out = pl.pallas_call(
            _linear_nobias_kernel,
            out_shape=jax.ShapeDtypeStruct((Mp, Np), x.dtype),
            grid=grid,
            in_specs=[pl.BlockSpec((tm, K), lambda i: (i, 0)),
                      pl.BlockSpec((K, Np), lambda i: (0, 0))],
            out_specs=pl.BlockSpec((tm, Np), lambda i: (i, 0)),
            compiler_params=cp,
        )(x, w)

    if Mp != M or Np != n_out:
        out = out[:M, :n_out]
    return out


# ---------------------------------------------------------------------------
# Pallas kernel: batched window attention
# ---------------------------------------------------------------------------
def _window_attn_kernel(q_ref, k_ref, v_ref, bias_ref, o_ref, *, nrep):
    """Processes nrep*(num_windows) windows per grid step.

    q/k/v/o blocks: (Gblk, S, D) with Gblk = nrep * NW; window index is the
    fastest-varying part of the block's leading axis, so the (NW, S, S) bias
    block tiles exactly nrep times over it.  Softmax scale is already folded
    into the Q projection weights.
    """
    nw, s, _ = bias_ref.shape
    q = q_ref[...]                                          # (Gblk, S, D)
    k = k_ref[...]
    v = v_ref[...]

    bias = jnp.broadcast_to(bias_ref[...][None], (nrep, nw, s, s))
    bias = bias.reshape(nrep * nw, s, s)

    dots = jnp.einsum('gqd,gkd->gqk', q, k,
                      preferred_element_type=jnp.float32) + bias
    m = jnp.max(dots, axis=-1, keepdims=True)
    p = jnp.exp(dots - m)
    denom = jnp.sum(p, axis=-1, keepdims=True)
    attn = p * pl.reciprocal(denom, approx=True)            # EUP slot, off the VALU
    out = jnp.einsum('gqk,gkd->gqd', attn.astype(v.dtype), v,
                     preferred_element_type=jnp.float32)
    o_ref[...] = out.astype(o_ref.dtype)


def pallas_window_attention(q, k, v, bias, *, target_windows=64):
    """q,k,v: (G, S, D) with G = batch*heads*num_windows, window index fastest.
       bias:  (NW, S, S) per-window additive bias (pos-emb + shift masks)."""
    G, S, D = q.shape
    NW = bias.shape[0]
    BH = G // NW

    # Batch several (batch, head) groups of windows per grid step; pick the
    # largest divisor of BH that keeps ~target_windows windows per block.
    nrep = min(BH, max(1, target_windows // max(NW, 1)))
    while BH % nrep:
        nrep -= 1
    Gblk = nrep * NW

    kern = functools.partial(_window_attn_kernel, nrep=nrep)
    return pl.pallas_call(
        kern,
        out_shape=jax.ShapeDtypeStruct((G, S, D), q.dtype),
        grid=(G // Gblk,),
        in_specs=[
            pl.BlockSpec((Gblk, S, D), lambda i: (i, 0, 0)),
            pl.BlockSpec((Gblk, S, D), lambda i: (i, 0, 0)),
            pl.BlockSpec((Gblk, S, D), lambda i: (i, 0, 0)),
            pl.BlockSpec((NW, S, S), lambda i: (0, 0, 0)),   # constant -> VMEM-resident
        ],
        out_specs=pl.BlockSpec((Gblk, S, D), lambda i: (i, 0, 0)),
        compiler_params=pltpu.CompilerParams(
            dimension_semantics=("parallel",),               # shards across v7x's 2 TCs
            vmem_limit_bytes=32 * 1024 * 1024),
    )(q, k, v, bias)


# ---------------------------------------------------------------------------
# WindowAttention module (parameters initialized deterministically in-script)
# ---------------------------------------------------------------------------
class WindowAttention:
    def __init__(self, dim, heads, head_dim, shifted, window_size,
                 relative_pos_embedding, key):
        inner_dim = head_dim * heads
        self.dim = dim
        self.heads = heads
        self.head_dim = head_dim
        self.inner_dim = inner_dim
        self.scale = head_dim ** (-0.5)
        self.window_size = window_size
        self.relative_pos_embedding = relative_pos_embedding
        self.shifted = shifted

        k1, k2, k3, k4 = jax.random.split(key, 4)
        # nn.Linear(dim, inner_dim*3, bias=False); stored (in, out)
        self.w_qkv = jax.random.normal(k1, (dim, inner_dim * 3), jnp.float32) * 0.02
        # nn.Linear(inner_dim, dim)
        self.w_out = jax.random.normal(k2, (inner_dim, dim), jnp.float32) * 0.02
        self.b_out = jax.random.normal(k3, (dim,), jnp.float32) * 0.02

        if shifted:
            disp = window_size // 2
            self.displacement = disp
            self.upper_lower_mask = jnp.asarray(
                create_mask(window_size, disp, upper_lower=True, left_right=False))
            self.left_right_mask = jnp.asarray(
                create_mask(window_size, disp, upper_lower=False, left_right=True))

        if relative_pos_embedding:
            self.relative_indices = get_relative_distances(window_size) + window_size - 1
            self.pos_embedding = jax.random.normal(
                k4, (2 * window_size - 1, 2 * window_size - 1), jnp.float32)
        else:
            self.pos_embedding = jax.random.normal(
                k4, (window_size ** 2, window_size ** 2), jnp.float32)

        # ---- static device-side tensors precomputed once (hoisted out of __call__) ----
        # Fold the softmax scale into the Q columns of w_qkv (exact same math,
        # zero runtime cost), then pad output columns to a multiple of 128 so
        # the qkv matmul's stores are lane-dense.
        w_qkv_fused = self.w_qkv.at[:, :inner_dim].multiply(self.scale)
        n_qkv = 3 * inner_dim
        n_qkv_pad = _round_up(n_qkv, 128)
        self._w_qkv_dev = jnp.pad(w_qkv_fused, ((0, 0), (0, n_qkv_pad - n_qkv)))
        self._n_qkv = n_qkv

        n_out_pad = _round_up(dim, 128)
        self._w_out_dev = jnp.pad(self.w_out, ((0, 0), (0, n_out_pad - dim)))
        self._b_out_dev = jnp.pad(self.b_out[None, :], ((0, 0), (0, n_out_pad - dim)))

        # Per-window positional bias (gather done once, not every forward).
        if relative_pos_embedding:
            self._pos_bias = self.pos_embedding[self.relative_indices[:, :, 0],
                                                self.relative_indices[:, :, 1]]
        else:
            self._pos_bias = self.pos_embedding
        self._bias_cache = {}

    def _get_bias(self, nw_h, nw_w):
        """(NW, S, S) additive bias = pos-embedding (+ shift masks), cached per grid size."""
        key = (nw_h, nw_w)
        cached = self._bias_cache.get(key)
        if cached is not None:
            return cached
        nw = nw_h * nw_w
        S = self.window_size ** 2
        bias = jnp.broadcast_to(self._pos_bias[None], (nw, S, S))
        if self.shifted:
            row_mask = jnp.asarray((np.arange(nw) // nw_w) == nw_h - 1)   # last window row
            col_mask = jnp.asarray((np.arange(nw) % nw_w) == nw_w - 1)    # last window col
            bias = jnp.where(row_mask[:, None, None],
                             bias + self.upper_lower_mask[None], bias)
            bias = jnp.where(col_mask[:, None, None],
                             bias + self.left_right_mask[None], bias)
        bias = jax.block_until_ready(bias)
        self._bias_cache[key] = bias
        return bias

    def __call__(self, x):
        ws, h, hd = self.window_size, self.heads, self.head_dim
        if self.shifted:
            x = jnp.roll(x, shift=(-self.displacement, -self.displacement), axis=(1, 2))
        b, n_h, n_w, _ = x.shape
        nw_h, nw_w = n_h // ws, n_w // ws
        nw = nw_h * nw_w
        S = ws * ws
        M = b * n_h * n_w

        # ---- qkv projection (tiled Pallas matmul, bias-free, scale folded in) ----
        qkv = pallas_linear(x.reshape(M, self.dim), self._w_qkv_dev, n_out=self._n_qkv)

        # ---- windowing (XLA reshape/transpose) ----
        # TODO(synk): fuse the window gather into the attention kernel's index_map
        # (blocks of (ws, ws) spatial tiles) to avoid this HBM round trip at scale.
        qkv = qkv.reshape(b, nw_h, ws, nw_w, ws, 3, h, hd)
        qkv = jnp.transpose(qkv, (5, 0, 6, 1, 3, 2, 4, 7))  # (3,b,h,nw_h,nw_w,ws,ws,hd)
        qkv = qkv.reshape(3, b * h * nw, S, hd)
        q, k, v = qkv[0], qkv[1], qkv[2]

        # ---- window attention (Pallas kernel: QK^T, bias, softmax, @V) ----
        bias = self._get_bias(nw_h, nw_w)
        out = pallas_window_attention(q, k, v, bias)

        # ---- un-window ----
        out = out.reshape(b, h, nw_h, nw_w, ws, ws, hd)
        out = jnp.transpose(out, (0, 2, 4, 3, 5, 1, 6)).reshape(b, n_h, n_w, self.inner_dim)

        # ---- output projection (tiled Pallas matmul with bias) ----
        out = pallas_linear(out.reshape(M, self.inner_dim),
                            self._w_out_dev, self._b_out_dev, n_out=self.dim)
        out = out.reshape(b, n_h, n_w, self.dim)
        if self.shifted:
            out = jnp.roll(out, shift=(self.displacement, self.displacement), axis=(1, 2))
        return out


# ---------------------------------------------------------------------------
# Pure-JAX reference (mirrors PyTorch forward) for validation
# ---------------------------------------------------------------------------
def reference_forward(m, x):
    ws, h, hd = m.window_size, m.heads, m.head_dim
    if m.shifted:
        x = jnp.roll(x, (-m.displacement, -m.displacement), axis=(1, 2))
    b, n_h, n_w, _ = x.shape
    nw_h, nw_w = n_h // ws, n_w // ws
    qkv = jnp.einsum('bijc,cd->bijd', x, m.w_qkv, precision='highest')
    qkv = qkv.reshape(b, nw_h, ws, nw_w, ws, 3, h, hd)
    qkv = jnp.transpose(qkv, (5, 0, 6, 1, 3, 2, 4, 7)).reshape(3, b, h, nw_h * nw_w, ws * ws, hd)
    q, k, v = qkv[0], qkv[1], qkv[2]
    dots = jnp.einsum('bhwid,bhwjd->bhwij', q, k, precision='highest') * m.scale
    if m.relative_pos_embedding:
        dots = dots + m.pos_embedding[m.relative_indices[:, :, 0], m.relative_indices[:, :, 1]]
    else:
        dots = dots + m.pos_embedding
    if m.shifted:
        dots = dots.at[:, :, -nw_w:].add(m.upper_lower_mask)
        dots = dots.at[:, :, nw_w - 1::nw_w].add(m.left_right_mask)
    attn = jax.nn.softmax(dots, axis=-1)
    out = jnp.einsum('bhwij,bhwjd->bhwid', attn, v, precision='highest')
    out = out.reshape(b, h, nw_h, nw_w, ws, ws, hd)
    out = jnp.transpose(out, (0, 2, 4, 3, 5, 1, 6)).reshape(b, n_h, n_w, h * hd)
    out = jnp.einsum('bijc,cd->bijd', out, m.w_out, precision='highest') + m.b_out
    if m.shifted:
        out = jnp.roll(out, (m.displacement, m.displacement), axis=(1, 2))
    return out


if __name__ == "__main__":
    key = jax.random.PRNGKey(0)
    kx, kp = jax.random.split(key)

    dim, heads, head_dim, window_size = 32, 2, 16, 4
    batch, n_h, n_w = 2, 8, 8

    mod = WindowAttention(dim=dim, heads=heads, head_dim=head_dim,
                          shifted=True, window_size=window_size,
                          relative_pos_embedding=True, key=kp)

    x = jax.random.normal(kx, (batch, n_h, n_w, dim), jnp.float32)

    out = jax.block_until_ready(mod(x))

    ref = jax.block_until_ready(reference_forward(mod, x))
    assert out.shape == ref.shape == (batch, n_h, n_w, dim)
    np.testing.assert_allclose(np.asarray(out), np.asarray(ref), rtol=2e-2, atol=2e-2)

    print("KERNEL_OK")
</pallas_src>

<mosaic_0001>
module attributes {stable_mosaic.version = 11 : i64} {
  func.func @_linear_nobias_kernel(%arg0: i32, %arg1: memref<128x32xf32, #tpu.memory_space<vmem>>, %arg2: memref<32x128xf32, #tpu.memory_space<vmem>>, %arg3: memref<128x128xf32, #tpu.memory_space<vmem>>) attributes {dimension_semantics = [#tpu.dimension_semantics<parallel>], iteration_bounds = array<i64: 1>, scalar_prefetch = 0 : i64, scratch_operands = 0 : i64, tpu.core_type = #tpu.core_type<tc>, window_params = [{transform_indices = @transform_0, window_bounds = array<i64: 128, 32>}, {pipeline_mode = #tpu.pipeline_mode<synchronous>, transform_indices = @transform_1, window_bounds = array<i64: 32, 128>}, {transform_indices = @transform_2, window_bounds = array<i64: 128, 128>}]} {
    %c0 = arith.constant 0 : index
    %c0_0 = arith.constant 0 : index
    %0 = vector.load %arg1[%c0, %c0_0] : memref<128x32xf32, #tpu.memory_space<vmem>>, vector<128x32xf32>
    %c0_1 = arith.constant 0 : index
    %c0_2 = arith.constant 0 : index
    %1 = vector.load %arg2[%c0_1, %c0_2] : memref<32x128xf32, #tpu.memory_space<vmem>>, vector<32x128xf32>
    %cst = arith.constant dense<0.000000e+00> : vector<128x128xf32>
    %2 = tpu.matmul %0, %1, %cst {dimension_numbers = #tpu.dot_dimension_numbers<[1], [0], [0], [1], [0, 0, 1, 1], [], []>} : vector<128x32xf32>, vector<32x128xf32>, vector<128x128xf32> -> vector<128x128xf32>
    %c0_3 = arith.constant 0 : index
    %c0_4 = arith.constant 0 : index
    %3 = vector.load %arg3[%c0_3, %c0_4] : memref<128x128xf32, #tpu.memory_space<vmem>>, vector<128x128xf32>
    tpu.vector_store %arg3[%c0_3, %c0_4], %2 {strides = array<i32>} : memref<128x128xf32, #tpu.memory_space<vmem>>, vector<128x128xf32>,
    return
  }
  func.func @transform_0(%arg0: i32) -> (i32, i32) {
    %c0_i32 = arith.constant 0 : i32
    %c0_i32_0 = arith.constant 0 : i32
    return %arg0, %c0_i32 : i32, i32
  }
  func.func @transform_1(%arg0: i32) -> (i32, i32) {
    %c0_i32 = arith.constant 0 : i32
    %c0_i32_0 = arith.constant 0 : i32
    %c0_i32_1 = arith.constant 0 : i32
    return %c0_i32, %c0_i32_0 : i32, i32
  }
  func.func @transform_2(%arg0: i32) -> (i32, i32) {
    %c0_i32 = arith.constant 0 : i32
    %c0_i32_0 = arith.constant 0 : i32
    return %arg0, %c0_i32 : i32, i32
  }
}

</mosaic_0001>

<llo_original>
// kernel: tpu_custom_call.1
$region0: #{tpu_custom_call.1}
  #allocation0 [shape = 'u32[]', space=smem, size = 0x4, offset = 0x4, fixed_abs, tag = 'smem constant byte address 0x4 - core index']
  #allocation1 [shape = 'u32[144,128]{1,0:T(1,128)}', space=vmem, size = 0x12000, scoped, tag = 'internal scratch']
  %s0 = inlined_call_operand.vmem [shape: f32[128,32], index: 0, kind: input, shape index: {}]
  %s1 = inlined_call_operand.vmem [shape: f32[32,128], index: 1, kind: input, shape index: {}]
  %s2 = inlined_call_operand.hbm [shape: f32[128,128], index: 2, kind: output, shape index: {}]
  %s3 = sld [smem:[#allocation0]]
  $region18: #{tpu_custom_call.1} parent=0
    _
  %s5 = ssub.s32 1, %s3
  %s6 = scalar_select 0, %s5, %s3
  $region1: #{tpu_custom_call.1} parent=0
    #allocation2 [shape = 'u8[65536]{0}', space=vmem, size = 0x10000, scoped, tag = 'output window, operand 0, single buffered']
    #allocation3 [shape = 's32[1]{0}', space=sflag, size = 0x4, scoped, tag = 'scoped memory for tpu_custom_call.1']
    %7 = vsyncpa [#allocation3], 0
    // Predicated region
    $region2: #{tpu_custom_call.1} parent=1 // pred_check
      _
    $region3: #{tpu_custom_call.1} parent=1 // pred_check_branch
      %9 = sbr.rel (0) target = $region5
    $region4: #{tpu_custom_call.1} parent=1 // pred_region
      _
    $region5: #{tpu_custom_call.1} parent=1 // pred_fallthru
      _
    // Predicated region
    $region6: #{tpu_custom_call.1} parent=1 // pred_check
      _
    $region7: #{tpu_custom_call.1} parent=1 // pred_check_branch
      %11 = sbr.rel (0) target = $region9
    $region8: #{tpu_custom_call.1} parent=1 // pred_region
      _
    $region9: #{tpu_custom_call.1} parent=1 // pred_fallthru
      _
    %v12 = vld [vmem:[%s0] sm:$0xff]
    %v13 = vld [vmem:[%s0 + $0x8] sm:$0xff]
    %v14 = vld [vmem:[%s0 + $0x10] sm:$0xff]
    %v15 = vld [vmem:[%s0 + $0x18] sm:$0xff]
    %v16 = vld [vmem:[%s0 + $0x20] sm:$0xff]
    %v17 = vld [vmem:[%s0 + $0x28] sm:$0xff]
    %v18 = vld [vmem:[%s0 + $0x30] sm:$0xff]
    %v19 = vld [vmem:[%s0 + $0x38] sm:$0xff]
    %v20 = vld [vmem:[%s0 + $0x40] sm:$0xff]
    %v21 = vld [vmem:[%s0 + $0x48] sm:$0xff]
    %v22 = vld [vmem:[%s0 + $0x50] sm:$0xff]
    %v23 = vld [vmem:[%s0 + $0x58] sm:$0xff]
    %v24 = vld [vmem:[%s0 + $0x60] sm:$0xff]
    %v25 = vld [vmem:[%s0 + $0x68] sm:$0xff]
    %v26 = vld [vmem:[%s0 + $0x70] sm:$0xff]
    %v27 = vld [vmem:[%s0 + $0x78] sm:$0xff]
    %v28 = vld [vmem:[%s1] sm:$0xff]
    %v29 = vld [vmem:[%s1 + $0x8] sm:$0xff]
    %v30 = vld [vmem:[%s1 + $0x10] sm:$0xff]
    %v31 = vld [vmem:[%s1 + $0x18] sm:$0xff]
    %vm32 = vcmask 261120
    %v34 = vsel %vm32, %v12, 0
    %v37 = vsel %vm32, %v13, 0
    %v40 = vsel %vm32, %v14, 0
    %v43 = vsel %vm32, %v15, 0
    %v46 = vsel %vm32, %v16, 0
    %v49 = vsel %vm32, %v17, 0
    %v52 = vsel %vm32, %v18, 0
    %v55 = vsel %vm32, %v19, 0
    %v58 = vsel %vm32, %v20, 0
    %v61 = vsel %vm32, %v21, 0
    %v64 = vsel %vm32, %v22, 0
    %v67 = vsel %vm32, %v23, 0
    %v70 = vsel %vm32, %v24, 0
    %v73 = vsel %vm32, %v25, 0
    %v76 = vsel %vm32, %v26, 0
    %v79 = vsel %vm32, %v27, 0
    %81 = vmatprep.subr.mxu0 0.0
    %82 = vmatpush1.msra.mxu0 0.0
    %83 = vmatprep.subr.mxu0 0.0
    %84 = vmatpush1.msra.mxu0 0.0
    %85 = vmatprep.subr.mxu0 0.0
    %86 = vmatpush1.msra.mxu0 0.0
    %87 = vmatprep.subr.mxu0 0.0
    %88 = vmatpush1.msra.mxu0 0.0
    %89 = vmatprep.subr.mxu0 0.0
    %90 = vmatpush1.msra.mxu0 0.0
    %91 = vmatprep.subr.mxu0 0.0
    %92 = vmatpush1.msra.mxu0 0.0
    %93 = vmatprep.subr.mxu0 0.0
    %94 = vmatpush1.msra.mxu0 0.0
    %95 = vmatprep.subr.mxu0 0.0
    %96 = vmatpush1.msra.mxu0 0.0
    %97 = vmatprep.subr.mxu0 0.0
    %98 = vmatpush1.msra.mxu0 0.0
    %99 = vmatprep.subr.mxu0 0.0
    %100 = vmatpush1.msra.mxu0 0.0
    %101 = vmatprep.subr.mxu0 0.0
    %102 = vmatpush1.msra.mxu0 0.0
    %103 = vmatprep.subr.mxu0 0.0
    %104 = vmatpush1.msra.mxu0 0.0
    %105 = vmatprep.subr.mxu0 0.0
    %106 = vmatpush1.msra.mxu0 %v31
    %107 = vmatprep.subr.mxu0 0.0
    %108 = vmatpush1.msra.mxu0 %v30
    %109 = vmatprep.subr.mxu0 0.0
    %110 = vmatpush1.msra.mxu0 %v29
    %111 = vmatprep.subr.mxu0 0.0
    %112 = vmatpush1.msra.mxu0 %v28
    %113 = vmatprep.subr.mxu0 0.0
    %114 = vmatpush2.msra.mxu0 0.0
    %115 = vmatprep.subr.mxu0 0.0
    %116 = vmatpush2.msra.mxu0 0.0
    %117 = vmatprep.subr.mxu0 0.0
    %118 = vmatpush2.msra.mxu0 0.0
    %119 = vmatprep.subr.mxu0 0.0
    %120 = vmatpush2.msra.mxu0 0.0
    %121 = vmatprep.subr.mxu0 0.0
    %122 = vmatpush2.msra.mxu0 0.0
    %123 = vmatprep.subr.mxu0 0.0
    %124 = vmatpush2.msra.mxu0 0.0
    %125 = vmatprep.subr.mxu0 0.0
    %126 = vmatpush2.msra.mxu0 0.0
    %127 = vmatprep.subr.mxu0 0.0
    %128 = vmatpush2.msra.mxu0 0.0
    %129 = vmatprep.subr.mxu0 0.0
    %130 = vmatpush2.msra.mxu0 0.0
    %131 = vmatprep.subr.mxu0 0.0
    %132 = vmatpush2.msra.mxu0 0.0
    %133 = vmatprep.subr.mxu0 0.0
    %134 = vmatpush2.msra.mxu0 0.0
    %135 = vmatprep.subr.mxu0 0.0
    %136 = vmatpush2.msra.mxu0 0.0
    %137 = vmatprep.subr.mxu0 0.0
    %138 = vmatpush2.msra.mxu0 0.0
    %139 = vmatprep.subr.mxu0 0.0
    %140 = vmatpush2.msra.mxu0 0.0
    %141 = vmatprep.subr.mxu0 0.0
    %142 = vmatpush2.msra.mxu0 0.0
    %143 = vmatprep.subr.mxu0 0.0
    %144 = vmatpush2.msra.mxu0 0.0
    %145 = vmatprep.mubr.f32.mxu0 0.0
    %146 = vmatmul.mubr.f32.gmra.mxu0 %v34
    %v147 = vpop.f32.mrf.mxu0
    %v148 = vadd.f32 0.0, %v147
    %v149 = vpop.f32.mrf.mxu0
    %150 = vmatprep.mubr.f32.mxu0 0.0
    %151 = vmatmul.mubr.f32.gmra.mxu0 %v37
    %v152 = vpop.f32.mrf.mxu0
    %v153 = vadd.f32 0.0, %v152
    %v154 = vpop.f32.mrf.mxu0
    %155 = vmatprep.mubr.f32.mxu0 0.0
    %156 = vmatmul.mubr.f32.gmra.mxu0 %v40
    %v157 = vpop.f32.mrf.mxu0
    %v158 = vadd.f32 0.0, %v157
    %v159 = vpop.f32.mrf.mxu0
    %160 = vmatprep.mubr.f32.mxu0 0.0
    %161 = vmatmul.mubr.f32.gmra.mxu0 %v43
    %v162 = vpop.f32.mrf.mxu0
    %v163 = vadd.f32 0.0, %v162
    %v164 = vpop.f32.mrf.mxu0
    %165 = vmatprep.mubr.f32.mxu0 0.0
    %166 = vmatmul.mubr.f32.gmra.mxu0 %v46
    %v167 = vpop.f32.mrf.mxu0
    %v168 = vadd.f32 0.0, %v167
    %v169 = vpop.f32.mrf.mxu0
    %170 = vmatprep.mubr.f32.mxu0 0.0
    %171 = vmatmul.mubr.f32.gmra.mxu0 %v49
    %v172 = vpop.f32.mrf.mxu0
    %v173 = vadd.f32 0.0, %v172
    %v174 = vpop.f32.mrf.mxu0
    %175 = vmatprep.mubr.f32.mxu0 0.0
    %176 = vmatmul.mubr.f32.gmra.mxu0 %v52
    %v177 = vpop.f32.mrf.mxu0
    %v178 = vadd.f32 0.0, %v177
    %v179 = vpop.f32.mrf.mxu0
    %180 = vmatprep.mubr.f32.mxu0 0.0
    %181 = vmatmul.mubr.f32.gmra.mxu0 %v55
    %v182 = vpop.f32.mrf.mxu0
    %v183 = vadd.f32 0.0, %v182
    %v184 = vpop.f32.mrf.mxu0
    %185 = vmatprep.mubr.f32.mxu0 0.0
    %186 = vmatmul.mubr.f32.gmra.mxu0 %v58
    %v187 = vpop.f32.mrf.mxu0
    %v188 = vadd.f32 0.0, %v187
    %v189 = vpop.f32.mrf.mxu0
    %190 = vmatprep.mubr.f32.mxu0 0.0
    %191 = vmatmul.mubr.f32.gmra.mxu0 %v61
    %v192 = vpop.f32.mrf.mxu0
    %v193 = vadd.f32 0.0, %v192
    %v194 = vpop.f32.mrf.mxu0
    %195 = vmatprep.mubr.f32.mxu0 0.0
    %196 = vmatmul.mubr.f32.gmra.mxu0 %v64
    %v197 = vpop.f32.mrf.mxu0
    %v198 = vadd.f32 0.0, %v197
    %v199 = vpop.f32.mrf.mxu0
    %200 = vmatprep.mubr.f32.mxu0 0.0
    %201 = vmatmul.mubr.f32.gmra.mxu0 %v67
    %v202 = vpop.f32.mrf.mxu0
    %v203 = vadd.f32 0.0, %v202
    %v204 = vpop.f32.mrf.mxu0
    %205 = vmatprep.mubr.f32.mxu0 0.0
    %206 = vmatmul.mubr.f32.gmra.mxu0 %v70
    %v207 = vpop.f32.mrf.mxu0
    %v208 = vadd.f32 0.0, %v207
    %v209 = vpop.f32.mrf.mxu0
    %210 = vmatprep.mubr.f32.mxu0 0.0
    %211 = vmatmul.mubr.f32.gmra.mxu0 %v73
    %v212 = vpop.f32.mrf.mxu0
    %v213 = vadd.f32 0.0, %v212
    %v214 = vpop.f32.mrf.mxu0
    %215 = vmatprep.mubr.f32.mxu0 0.0
    %216 = vmatmul.mubr.f32.gmra.mxu0 %v76
    %v217 = vpop.f32.mrf.mxu0
    %v218 = vadd.f32 0.0, %v217
    %v219 = vpop.f32.mrf.mxu0
    %220 = vmatprep.mubr.f32.mxu0 0.0
    %221 = vmatmul.mubr.f32.gmra.mxu0 %v79
    %v222 = vpop.f32.mrf.mxu0
    %v223 = vadd.f32 0.0, %v222
    %v224 = vpop.f32.mrf.mxu0
    %225 = vdwg.mxu0
    %226 = vst [vmem:[#allocation2] sm:$0xff] %v148
    %227 = vst [vmem:[#allocation2 + $0x8] sm:$0xff] %v153
    %228 = vst [vmem:[#allocation2 + $0x10] sm:$0xff] %v158
    %229 = vst [vmem:[#allocation2 + $0x18] sm:$0xff] %v163
    %230 = vst [vmem:[#allocation2 + $0x20] sm:$0xff] %v168
    %231 = vst [vmem:[#allocation2 + $0x28] sm:$0xff] %v173
    %232 = vst [vmem:[#allocation2 + $0x30] sm:$0xff] %v178
    %233 = vst [vmem:[#allocation2 + $0x38] sm:$0xff] %v183
    %234 = vst [vmem:[#allocation2 + $0x40] sm:$0xff] %v188
    %235 = vst [vmem:[#allocation2 + $0x48] sm:$0xff] %v193
    %236 = vst [vmem:[#allocation2 + $0x50] sm:$0xff] %v198
    %237 = vst [vmem:[#allocation2 + $0x58] sm:$0xff] %v203
    %238 = vst [vmem:[#allocation2 + $0x60] sm:$0xff] %v208
    %239 = vst [vmem:[#allocation2 + $0x68] sm:$0xff] %v213
    %240 = vst [vmem:[#allocation2 + $0x70] sm:$0xff] %v218
    %241 = vst [vmem:[#allocation2 + $0x78] sm:$0xff] %v223
    // Predicated region
    $region10: #{tpu_custom_call.1} parent=1 // pred_check
      _
    $region11: #{tpu_custom_call.1} parent=1 // pred_check_branch
      %243 = sbr.rel (0) target = $region13
    $region12: #{tpu_custom_call.1} parent=1 // pred_region
      %s245 = ssub.s32 2048, 2048
      %246 = vsyncadd [#allocation3], %s245
      %s247 = sshll.u32 [#allocation2], 4
      %s248 = int_to_ptr.vmem [resolvable:$true] %s247
      %253 = dma.vmem_to_hbm [thread:$0]  %s248, 2048, %s2, [#allocation3], 128, 128, 8
    $region13: #{tpu_custom_call.1} parent=1 // pred_fallthru
      _
    // Predicated region
    $region14: #{tpu_custom_call.1} parent=1 // pred_check
      _
    $region15: #{tpu_custom_call.1} parent=1 // pred_check_branch
      %255 = sbr.rel (0) target = $region17
    $region16: #{tpu_custom_call.1} parent=1 // pred_region
      %256 = dma.done [#allocation3], 2048
    $region17: #{tpu_custom_call.1} parent=1 // pred_fallthru
      _
    %257 = vsyncpa [#allocation3], 1

</llo_original>
